<compile_context>
chip_gen: v6e
topology: v6e:2x2x1
jax: 0.10.0
libtpu: 0.0.40
codegen_flags: <defaults>
</compile_context>

<pallas_src>
import math

import jax
import jax.numpy as jnp
from jax.experimental import pallas as pl
from jax.experimental.pallas import tpu as pltpu

_LOG4 = math.log(4.0)
_MAX_TR = 8192                      # packed rows per grid step (~4 MiB f32)
_VMEM_LIMIT = 32 * 1024 * 1024      # generous, safe on v5e/v6e/v7x


def _ceil_div(a, b):
    return -(-a // b)


def _round_up(a, b):
    return _ceil_div(a, b) * b


# ----------------------------------------------------------------------------
# Pallas kernel 1: packed Gram accumulation over the d axis
# ----------------------------------------------------------------------------
def _gram_kernel(x_ref, p_ref):
    # x_ref: (TR, 128) packed gradient tile (lane-dense)
    # p_ref: (1, 128, 128) resident partial-Gram accumulator for this split
    @pl.when(pl.program_id(1) == 0)
    def _init():
        p_ref[...] = jnp.zeros_like(p_ref)

    y = x_ref[...]
    p_ref[...] += jax.lax.dot_general(
        y, y, (((0,), (0,)), ((), ())), preferred_element_type=jnp.float32
    )[None]


def packed_gram(x_packed, nsplit, steps_per_split, tr):
    return pl.pallas_call(
        _gram_kernel,
        out_shape=jax.ShapeDtypeStruct((nsplit, 128, 128), jnp.float32),
        grid=(nsplit, steps_per_split),
        in_specs=[
            pl.BlockSpec((tr, 128), lambda c, k: (c * steps_per_split + k, 0))
        ],
        out_specs=pl.BlockSpec((1, 128, 128), lambda c, k: (c, 0, 0)),
        compiler_params=pltpu.CompilerParams(
            dimension_semantics=("parallel", "arbitrary"),
            vmem_limit_bytes=_VMEM_LIMIT,
        ),
    )(x_packed)


# ----------------------------------------------------------------------------
# Pallas kernel 2: fused krum gather + newkrum weighted sum (block-diag matmul)
# ----------------------------------------------------------------------------
def _combine_kernel(w_ref, x_ref, o_ref):
    # w_ref: (128, 2g) block-diagonal weights (resident, tiny)
    # x_ref: (TR, 128) packed gradient tile
    # o_ref: (TR, 2g) interleaved outputs: col 2t+0 = newkrum, 2t+1 = krum
    o_ref[...] = jnp.dot(
        x_ref[...], w_ref[...], preferred_element_type=jnp.float32
    )


def packed_combine(x_packed, w_big, steps, tr):
    r_pad, _ = x_packed.shape
    two_g = w_big.shape[1]
    return pl.pallas_call(
        _combine_kernel,
        out_shape=jax.ShapeDtypeStruct((r_pad, two_g), jnp.float32),
        grid=(steps,),
        in_specs=[
            pl.BlockSpec((128, two_g), lambda k: (0, 0)),
            pl.BlockSpec((tr, 128), lambda k: (k, 0)),
        ],
        out_specs=pl.BlockSpec((tr, two_g), lambda k: (k, 0)),
        compiler_params=pltpu.CompilerParams(
            dimension_semantics=("parallel",),
            vmem_limit_bytes=_VMEM_LIMIT,
        ),
    )(w_big, x_packed)


# ----------------------------------------------------------------------------
# Scalar glue (mirrors MinNormalR / MinNormalS / reputation bookkeeping)
# ----------------------------------------------------------------------------
def _entropy4(q):
    safe = jnp.where(q != 0, q, 1.0)
    s = jnp.sum(jnp.where(q != 0, q * jnp.log(safe), 0.0))
    return -1.0 / _LOG4 * s


def _min_normal_r(data):
    mn, mx = data.min(), data.max()
    same = mn == mx
    denom = jnp.where(same, 1.0, mx - mn)
    normalized = jnp.where(same, data, (data - mn) / denom)
    q = normalized / jnp.sum(normalized)
    return normalized, _entropy4(q)


def _min_normal_s(data):
    mn, mx = data.min(), data.max()
    same = mn == mx
    denom = jnp.where(same, 1.0, mx - mn)
    normalized = jnp.where(same, data, (mx - data) / denom)
    p = normalized / jnp.sum(normalized)
    return normalized, _entropy4(p)


def get_krum(inp, r_all):
    # inp: (1, d, n) ; r_all: (10,) reputation state (torch global r_all)
    b, d, n = inp.shape
    assert b == 1, "reference implementation hard-codes batch index 0"
    assert n <= r_all.shape[0], "reputation table smaller than client count"
    # TODO(synk): packed layout assumes the client count divides 128.
    assert 128 % n == 0, "packed Gram/combine requires n | 128"

    g = 128 // n
    f = n // 2
    k = n - f - 2

    inp = inp.astype(jnp.float32)

    # ---- packed (rows, 128) view of the native (d, n) slab -----------------
    L = d * n
    R = _ceil_div(L, 128)
    nsplit = 2 if R >= 16 else 1                       # megacore split (v7x)
    steps = _round_up(max(nsplit, _ceil_div(R, _MAX_TR)), nsplit)
    tr = _round_up(_ceil_div(R, steps), 8)
    r_pad = steps * tr
    steps_per_split = steps // nsplit

    flat = inp.reshape(L)
    pad = r_pad * 128 - L
    if pad:
        flat = jnp.concatenate([flat, jnp.zeros((pad,), jnp.float32)])
    x_packed = flat.reshape(r_pad, 128)                # packed[r, n*t + c]

    # ---- kernel 1: pairwise Euclidean distances -----------------------------
    partials = packed_gram(x_packed, nsplit, steps_per_split, tr)
    P = partials.sum(0)                                # (128, 128)
    # fold the g diagonal (n, n) sub-blocks: G[c1,c2] = sum_t P[n*t+c1, n*t+c2]
    idx = jnp.arange(g)
    G = P.reshape(g, n, g, n)[idx, :, idx, :].sum(0)   # (n, n)
    # NOTE: Gram-form cdist (vs torch's direct-difference path) can lose
    # precision for near-identical client gradients; clamp before sqrt.
    sq = jnp.diagonal(G)
    d2 = jnp.maximum(sq[:, None] + sq[None, :] - 2.0 * G, 0.0)
    cdist = jnp.sqrt(d2)

    # k+1 smallest distances per row (includes self-distance 0), ascending.
    nbh_dist = -jax.lax.top_k(-cdist, k + 1)[0]        # (n, k+1)
    nbh_sum = jnp.sum(nbh_dist, axis=1)                # (n,)
    neg_score, ii_star = jax.lax.top_k(-nbh_sum, 4)    # 4 smallest neighbor sums
    score = -neg_score                                 # (4,) == score1.sum(2)[0]

    _, Es = _min_normal_s(score)

    # reputation update:  if r_all[i] < 1: r_all[i] += 0.05
    inc = jnp.where(r_all[ii_star] < 1.0, 0.05, 0.0)
    r_all = r_all.at[ii_star].add(inc)
    reputation = r_all[ii_star]                        # (4,)
    _, Er = _min_normal_r(reputation)

    alpha = (1.0 - Es) / (2.0 - Es - Er)
    beta = (1.0 - Er) / (2.0 - Es - Er)
    combo = alpha * score + beta * reputation
    xi = combo / jnp.sum(combo)                        # (4,)

    # per-client weights: row 0 = newkrum (xi scattered), row 1 = krum one-hot
    w = jnp.zeros((n,), jnp.float32).at[ii_star].set(xi)
    e0 = jnp.zeros((n,), jnp.float32).at[ii_star[0]].set(1.0)
    w2 = jnp.stack([w, e0], axis=0)                    # (2, n)

    # block-diagonal (128, 2g) weight matrix: W[n*t + c, 2*t + m] = w2[m, c]
    w_big = (
        jnp.eye(g, dtype=jnp.float32)[:, None, :, None]
        * w2.T[None, :, None, :]
    ).reshape(128, 2 * g)

    # ---- kernel 2: fused combine --------------------------------------------
    z = packed_combine(x_packed, w_big, steps, tr)     # (r_pad, 2g)
    out2 = z.reshape(r_pad * g, 2)[:d]                 # (d, 2): de-interleave
    newkrum = out2[:, 0][None, :, None]                # (1, d, 1)
    krum = out2[:, 1][None, :, None]                   # (1, d, 1)
    return krum, newkrum, r_all


_get_krum = jax.jit(get_krum)


class Net:
    """JAX/Pallas port of the PyTorch Net (mode in {'krum', 'newkrum'})."""

    def __init__(self, mode="newkrum"):
        assert mode in ("krum", "newkrum")
        self.mode = mode
        # deterministic init of the (global) reputation vector, as torch.zeros(10)
        self.r_all = jnp.zeros((10,), jnp.float32)

    def __call__(self, inp):
        krum, newkrum, self.r_all = _get_krum(inp, self.r_all)
        return krum if self.mode == "krum" else newkrum


if __name__ == "__main__":
    key = jax.random.PRNGKey(0)
    batch, d, n = 1, 32, 8          # batch * vector_dim * n_clients
    inp = jax.random.normal(key, (batch, d, n), dtype=jnp.float32)

    net = Net(mode="newkrum")
    out = net(inp)                  # first step (also updates reputation state)
    out = net(inp)                  # second step exercises the r_all carry
    out = jax.block_until_ready(out)

    assert out.shape == (batch, d, 1)
    assert bool(jnp.all(jnp.isfinite(out)))
    print("KERNEL_OK")
</pallas_src>

<mosaic_0001>
module attributes {stable_mosaic.version = 11 : i64} {
  func.func @_gram_kernel(%arg0: i32, %arg1: i32, %arg2: memref<8x128xf32, #tpu.memory_space<vmem>>, %arg3: memref<1x128x128xf32, #tpu.memory_space<vmem>>) attributes {dimension_semantics = [#tpu.dimension_semantics<parallel>, #tpu.dimension_semantics<arbitrary>], iteration_bounds = array<i64: 1, 1>, scalar_prefetch = 0 : i64, scratch_operands = 0 : i64, tpu.core_type = #tpu.core_type<tc>, window_params = [{transform_indices = @transform_0, window_bounds = array<i64: 8, 128>}, {transform_indices = @transform_1, window_bounds = array<i64: 1, 128, 128>}]} {
    %c0_i32 = arith.constant 0 : i32
    %0 = arith.cmpi eq, %arg1, %c0_i32 : i32
    %1 = arith.extui %0 : i1 to i32
    %c0_i32_0 = arith.constant 0 : i32
    %2 = arith.cmpi ne, %1, %c0_i32_0 : i32
    scf.if %2 {
      %cst_8 = arith.constant 0.000000e+00 : f32
      %9 = vector.broadcast %cst_8 : f32 to vector<1x128x128xf32>
      %c0_9 = arith.constant 0 : index
      %c0_10 = arith.constant 0 : index
      %c0_11 = arith.constant 0 : index
      %10 = vector.load %arg3[%c0_9, %c0_10, %c0_11] : memref<1x128x128xf32, #tpu.memory_space<vmem>>, vector<1x128x128xf32>
      tpu.vector_store %arg3[%c0_9, %c0_10, %c0_11], %9 {strides = array<i32>} : memref<1x128x128xf32, #tpu.memory_space<vmem>>, vector<1x128x128xf32>,
    } else {
    }
    %c0 = arith.constant 0 : index
    %c0_1 = arith.constant 0 : index
    %3 = vector.load %arg2[%c0, %c0_1] : memref<8x128xf32, #tpu.memory_space<vmem>>, vector<8x128xf32>
    %c0_2 = arith.constant 0 : index
    %c0_3 = arith.constant 0 : index
    %c0_4 = arith.constant 0 : index
    %4 = vector.load %arg3[%c0_2, %c0_3, %c0_4] : memref<1x128x128xf32, #tpu.memory_space<vmem>>, vector<1x128x128xf32>
    %cst = arith.constant dense<0.000000e+00> : vector<128x128xf32>
    %5 = tpu.matmul %3, %3, %cst {dimension_numbers = #tpu.dot_dimension_numbers<[0], [0], [1], [1], [0, 1, 1, 1], [], []>} : vector<8x128xf32>, vector<8x128xf32>, vector<128x128xf32> -> vector<128x128xf32>
    %6 = vector.shape_cast %5 : vector<128x128xf32> to vector<1x128x128xf32>
    %7 = arith.addf %4, %6 : vector<1x128x128xf32>
    %c0_5 = arith.constant 0 : index
    %c0_6 = arith.constant 0 : index
    %c0_7 = arith.constant 0 : index
    %8 = vector.load %arg3[%c0_5, %c0_6, %c0_7] : memref<1x128x128xf32, #tpu.memory_space<vmem>>, vector<1x128x128xf32>
    tpu.vector_store %arg3[%c0_5, %c0_6, %c0_7], %7 {strides = array<i32>} : memref<1x128x128xf32, #tpu.memory_space<vmem>>, vector<1x128x128xf32>,
    return
  }
  func.func @transform_0(%arg0: i32, %arg1: i32) -> (i32, i32) {
    %c1_i32 = arith.constant 1 : i32
    %0 = arith.muli %arg0, %c1_i32 : i32
    %1 = arith.addi %0, %arg1 : i32
    %c0_i32 = arith.constant 0 : i32
    %c0_i32_0 = arith.constant 0 : i32
    return %1, %c0_i32 : i32, i32
  }
  func.func @transform_1(%arg0: i32, %arg1: i32) -> (i32, i32, i32) {
    %c0_i32 = arith.constant 0 : i32
    %c0_i32_0 = arith.constant 0 : i32
    %c0_i32_1 = arith.constant 0 : i32
    return %arg0, %c0_i32, %c0_i32_0 : i32, i32, i32
  }
}

module attributes {stable_mosaic.version = 11 : i64} {
  func.func @_combine_kernel(%arg0: i32, %arg1: memref<128x32xf32, #tpu.memory_space<vmem>>, %arg2: memref<8x128xf32, #tpu.memory_space<vmem>>, %arg3: memref<8x32xf32, #tpu.memory_space<vmem>>) attributes {dimension_semantics = [#tpu.dimension_semantics<parallel>], iteration_bounds = array<i64: 1>, scalar_prefetch = 0 : i64, scratch_operands = 0 : i64, tpu.core_type = #tpu.core_type<tc>, window_params = [{pipeline_mode = #tpu.pipeline_mode<synchronous>, transform_indices = @transform_0, window_bounds = array<i64: 128, 32>}, {transform_indices = @transform_1, window_bounds = array<i64: 8, 128>}, {transform_indices = @transform_2, window_bounds = array<i64: 8, 32>}]} {
    %c0 = arith.constant 0 : index
    %c0_0 = arith.constant 0 : index
    %0 = vector.load %arg2[%c0, %c0_0] : memref<8x128xf32, #tpu.memory_space<vmem>>, vector<8x128xf32>
    %c0_1 = arith.constant 0 : index
    %c0_2 = arith.constant 0 : index
    %1 = vector.load %arg1[%c0_1, %c0_2] : memref<128x32xf32, #tpu.memory_space<vmem>>, vector<128x32xf32>
    %cst = arith.constant dense<0.000000e+00> : vector<8x32xf32>
    %2 = tpu.matmul %0, %1, %cst {dimension_numbers = #tpu.dot_dimension_numbers<[1], [0], [0], [1], [0, 0, 1, 1], [], []>} : vector<8x128xf32>, vector<128x32xf32>, vector<8x32xf32> -> vector<8x32xf32>
    %c0_3 = arith.constant 0 : index
    %c0_4 = arith.constant 0 : index
    %3 = vector.load %arg3[%c0_3, %c0_4] : memref<8x32xf32, #tpu.memory_space<vmem>>, vector<8x32xf32>
    tpu.vector_store %arg3[%c0_3, %c0_4], %2 {strides = array<i32>} : memref<8x32xf32, #tpu.memory_space<vmem>>, vector<8x32xf32>,
    return
  }
  func.func @transform_0(%arg0: i32) -> (i32, i32) {
    %c0_i32 = arith.constant 0 : i32
    %c0_i32_0 = arith.constant 0 : i32
    %c0_i32_1 = arith.constant 0 : i32
    return %c0_i32, %c0_i32_0 : i32, i32
  }
  func.func @transform_1(%arg0: i32) -> (i32, i32) {
    %c0_i32 = arith.constant 0 : i32
    %c0_i32_0 = arith.constant 0 : i32
    return %arg0, %c0_i32 : i32, i32
  }
  func.func @transform_2(%arg0: i32) -> (i32, i32) {
    %c0_i32 = arith.constant 0 : i32
    %c0_i32_0 = arith.constant 0 : i32
    return %arg0, %c0_i32 : i32, i32
  }
}

</mosaic_0001>

<llo_original>
// kernel: get_krum.2
$region0: #{get_krum.2}
  #allocation0 [shape = 'u32[]', space=smem, size = 0x4, offset = 0x4, fixed_abs, tag = 'smem constant byte address 0x4 - core index']
  #allocation1 [shape = 'u32[144,128]{1,0:T(1,128)}', space=vmem, size = 0x12000, scoped, tag = 'internal scratch']
  %s0 = inlined_call_operand.vmem [shape: f32[8,128], index: 0, kind: input, shape index: {}]
  %s1 = inlined_call_operand.vmem [shape: f32[1,128,128], index: 1, kind: output, shape index: {}]
  %s2 = sld [smem:[#allocation0]]
  $region18: #{get_krum.2} parent=0
    _
  %s4 = ssub.s32 1, %s2
  %s5 = scalar_select 0, %s4, %s2
  // Predicated region
  $region2: #{get_krum.2} parent=0 // pred_check
    _
  $region3: #{get_krum.2} parent=0 // pred_check_branch
    %7 = sbr.rel (0) target = $region5
  $region4: #{get_krum.2} parent=0 // pred_region
    %s8 = sadd.s32 0, 0
    %p9 = scmp.lt.s32.totalorder %s8, 0
    %s10 = scalar_select %p9, %s8, 0
    %s11 = smul.addr %s10, 8
    %s12 = scalar_lea.vmem %s0, %s11
    %s13 = sadd.s32 0, 0
  $region5: #{get_krum.2} parent=0 // pred_fallthru
    _
  %s14 = sadd.s32 0, 0
  %p15 = scmp.lt.s32.totalorder %s14, 0
  %s16 = scalar_select %p15, %s14, 0
  %s17 = smul.addr %s16, 8
  %s18 = scalar_lea.vmem %s0, %s17
  %s19 = sadd.s32 0, 0
  %p20 = scmp.lt.s32.totalorder %s19, 0
  %s21 = scalar_select %p20, %s19, 0
  %s22 = smul.addr %s21, 8
  %s23 = scalar_lea.vmem %s0, %s22
  %s24 = sadd.s32 0, 0
  %p25 = scmp.eq.s32.totalorder 0, 0
  // Predicated region
  $region6: #{get_krum.2} parent=0 // pred_check
    %p26 = pneg %p25
  $region7: #{get_krum.2} parent=0 // pred_check_branch
    %28 = sbr.rel (%p26) target = $region9
  $region8: #{get_krum.2} parent=0 // pred_region
    %29 = vst [vmem:[%s1] sm:$0xff] 0.0
    %30 = vst [vmem:[%s1 + $0x8] sm:$0xff] 0.0
    %31 = vst [vmem:[%s1 + $0x10] sm:$0xff] 0.0
    %32 = vst [vmem:[%s1 + $0x18] sm:$0xff] 0.0
    %33 = vst [vmem:[%s1 + $0x20] sm:$0xff] 0.0
    %34 = vst [vmem:[%s1 + $0x28] sm:$0xff] 0.0
    %35 = vst [vmem:[%s1 + $0x30] sm:$0xff] 0.0
    %36 = vst [vmem:[%s1 + $0x38] sm:$0xff] 0.0
    %37 = vst [vmem:[%s1 + $0x40] sm:$0xff] 0.0
    %38 = vst [vmem:[%s1 + $0x48] sm:$0xff] 0.0
    %39 = vst [vmem:[%s1 + $0x50] sm:$0xff] 0.0
    %40 = vst [vmem:[%s1 + $0x58] sm:$0xff] 0.0
    %41 = vst [vmem:[%s1 + $0x60] sm:$0xff] 0.0
    %42 = vst [vmem:[%s1 + $0x68] sm:$0xff] 0.0
    %43 = vst [vmem:[%s1 + $0x70] sm:$0xff] 0.0
    %44 = vst [vmem:[%s1 + $0x78] sm:$0xff] 0.0
  $region9: #{get_krum.2} parent=0 // pred_fallthru
    _
  %v45 = vld [vmem:[%s23] sm:$0xff]
  %v46 = vld [vmem:[%s1] sm:$0xff]
  %v47 = vld [vmem:[%s1 + $0x8] sm:$0xff]
  %v48 = vld [vmem:[%s1 + $0x10] sm:$0xff]
  %v49 = vld [vmem:[%s1 + $0x18] sm:$0xff]
  %v50 = vld [vmem:[%s1 + $0x20] sm:$0xff]
  %v51 = vld [vmem:[%s1 + $0x28] sm:$0xff]
  %v52 = vld [vmem:[%s1 + $0x30] sm:$0xff]
  %v53 = vld [vmem:[%s1 + $0x38] sm:$0xff]
  %v54 = vld [vmem:[%s1 + $0x40] sm:$0xff]
  %v55 = vld [vmem:[%s1 + $0x48] sm:$0xff]
  %v56 = vld [vmem:[%s1 + $0x50] sm:$0xff]
  %v57 = vld [vmem:[%s1 + $0x58] sm:$0xff]
  %v58 = vld [vmem:[%s1 + $0x60] sm:$0xff]
  %v59 = vld [vmem:[%s1 + $0x68] sm:$0xff]
  %v60 = vld [vmem:[%s1 + $0x70] sm:$0xff]
  %v61 = vld [vmem:[%s1 + $0x78] sm:$0xff]
  %62 = vxpose.xlu0.b32.start [1/16] %v45, 128
  %63 = vxpose.xlu0.b32.cont [2/16] 0.0, 128
  %64 = vxpose.xlu0.b32.cont [3/16] 0.0, 128
  %65 = vxpose.xlu0.b32.cont [4/16] 0.0, 128
  %66 = vxpose.xlu0.b32.cont [5/16] 0.0, 128
  %67 = vxpose.xlu0.b32.cont [6/16] 0.0, 128
  %68 = vxpose.xlu0.b32.cont [7/16] 0.0, 128
  %69 = vxpose.xlu0.b32.cont [8/16] 0.0, 128
  %70 = vxpose.xlu0.b32.cont [9/16] 0.0, 128
  %71 = vxpose.xlu0.b32.cont [10/16] 0.0, 128
  %72 = vxpose.xlu0.b32.cont [11/16] 0.0, 128
  %73 = vxpose.xlu0.b32.cont [12/16] 0.0, 128
  %74 = vxpose.xlu0.b32.cont [13/16] 0.0, 128
  %75 = vxpose.xlu0.b32.cont [14/16] 0.0, 128
  %76 = vxpose.xlu0.b32.cont [15/16] 0.0, 128
  %77 = vxpose.xlu0.b32.end [16/16] 0.0, 128
  %v78 = vpop.trf.xlu0
  %v79 = vpop.trf.xlu0
  %v80 = vpop.trf.xlu0
  %v81 = vpop.trf.xlu0
  %v82 = vpop.trf.xlu0
  %v83 = vpop.trf.xlu0
  %v84 = vpop.trf.xlu0
  %v85 = vpop.trf.xlu0
  %v86 = vpop.trf.xlu0
  %v87 = vpop.trf.xlu0
  %v88 = vpop.trf.xlu0
  %v89 = vpop.trf.xlu0
  %v90 = vpop.trf.xlu0
  %v91 = vpop.trf.xlu0
  %v92 = vpop.trf.xlu0
  %v93 = vpop.trf.xlu0
  %vm94 = vcmask 64512
  %v96 = vsel %vm94, %v78, 0
  %v99 = vsel %vm94, %v79, 0
  %v102 = vsel %vm94, %v80, 0
  %v105 = vsel %vm94, %v81, 0
  %v108 = vsel %vm94, %v82, 0
  %v111 = vsel %vm94, %v83, 0
  %v114 = vsel %vm94, %v84, 0
  %v117 = vsel %vm94, %v85, 0
  %v120 = vsel %vm94, %v86, 0
  %v123 = vsel %vm94, %v87, 0
  %v126 = vsel %vm94, %v88, 0
  %v129 = vsel %vm94, %v89, 0
  %v132 = vsel %vm94, %v90, 0
  %v135 = vsel %vm94, %v91, 0
  %v138 = vsel %vm94, %v92, 0
  %v141 = vsel %vm94, %v93, 0
  %143 = vmatprep.subr.mxu0 0.0
  %144 = vmatpush1.msra.mxu0 0.0
  %145 = vmatprep.subr.mxu0 0.0
  %146 = vmatpush1.msra.mxu0 0.0
  %147 = vmatprep.subr.mxu0 0.0
  %148 = vmatpush1.msra.mxu0 0.0
  %149 = vmatprep.subr.mxu0 0.0
  %150 = vmatpush1.msra.mxu0 0.0
  %151 = vmatprep.subr.mxu0 0.0
  %152 = vmatpush1.msra.mxu0 0.0
  %153 = vmatprep.subr.mxu0 0.0
  %154 = vmatpush1.msra.mxu0 0.0
  %155 = vmatprep.subr.mxu0 0.0
  %156 = vmatpush1.msra.mxu0 0.0
  %157 = vmatprep.subr.mxu0 0.0
  %158 = vmatpush1.msra.mxu0 0.0
  %159 = vmatprep.subr.mxu0 0.0
  %160 = vmatpush1.msra.mxu0 0.0
  %161 = vmatprep.subr.mxu0 0.0
  %162 = vmatpush1.msra.mxu0 0.0
  %163 = vmatprep.subr.mxu0 0.0
  %164 = vmatpush1.msra.mxu0 0.0
  %165 = vmatprep.subr.mxu0 0.0
  %166 = vmatpush1.msra.mxu0 0.0
  %167 = vmatprep.subr.mxu0 0.0
  %168 = vmatpush1.msra.mxu0 0.0
  %169 = vmatprep.subr.mxu0 0.0
  %170 = vmatpush1.msra.mxu0 0.0
  %171 = vmatprep.subr.mxu0 0.0
  %172 = vmatpush1.msra.mxu0 0.0
  %173 = vmatprep.subr.mxu0 0.0
  %174 = vmatpush1.msra.mxu0 %v45
  %175 = vmatprep.subr.mxu0 0.0
  %176 = vmatpush2.msra.mxu0 0.0
  %177 = vmatprep.subr.mxu0 0.0
  %178 = vmatpush2.msra.mxu0 0.0
  %179 = vmatprep.subr.mxu0 0.0
  %180 = vmatpush2.msra.mxu0 0.0
  %181 = vmatprep.subr.mxu0 0.0
  %182 = vmatpush2.msra.mxu0 0.0
  %183 = vmatprep.subr.mxu0 0.0
  %184 = vmatpush2.msra.mxu0 0.0
  %185 = vmatprep.subr.mxu0 0.0
  %186 = vmatpush2.msra.mxu0 0.0
  %187 = vmatprep.subr.mxu0 0.0
  %188 = vmatpush2.msra.mxu0 0.0
  %189 = vmatprep.subr.mxu0 0.0
  %190 = vmatpush2.msra.mxu0 0.0
  %191 = vmatprep.subr.mxu0 0.0
  %192 = vmatpush2.msra.mxu0 0.0
  %193 = vmatprep.subr.mxu0 0.0
  %194 = vmatpush2.msra.mxu0 0.0
  %195 = vmatprep.subr.mxu0 0.0
  %196 = vmatpush2.msra.mxu0 0.0
  %197 = vmatprep.subr.mxu0 0.0
  %198 = vmatpush2.msra.mxu0 0.0
  %199 = vmatprep.subr.mxu0 0.0
  %200 = vmatpush2.msra.mxu0 0.0
  %201 = vmatprep.subr.mxu0 0.0
  %202 = vmatpush2.msra.mxu0 0.0
  %203 = vmatprep.subr.mxu0 0.0
  %204 = vmatpush2.msra.mxu0 0.0
  %205 = vmatprep.subr.mxu0 0.0
  %206 = vmatpush2.msra.mxu0 0.0
  %207 = vmatprep.mubr.f32.mxu0 0.0
  %208 = vmatmul.mubr.f32.gmra.mxu0 %v96
  %v209 = vpop.f32.mrf.mxu0
  %v210 = vadd.f32 0.0, %v209
  %v211 = vpop.f32.mrf.mxu0
  %212 = vmatprep.mubr.f32.mxu0 0.0
  %213 = vmatmul.mubr.f32.gmra.mxu0 %v99
  %v214 = vpop.f32.mrf.mxu0
  %v215 = vadd.f32 0.0, %v214
  %v216 = vpop.f32.mrf.mxu0
  %217 = vmatprep.mubr.f32.mxu0 0.0
  %218 = vmatmul.mubr.f32.gmra.mxu0 %v102
  %v219 = vpop.f32.mrf.mxu0
  %v220 = vadd.f32 0.0, %v219
  %v221 = vpop.f32.mrf.mxu0
  %222 = vmatprep.mubr.f32.mxu0 0.0
  %223 = vmatmul.mubr.f32.gmra.mxu0 %v105
  %v224 = vpop.f32.mrf.mxu0
  %v225 = vadd.f32 0.0, %v224
  %v226 = vpop.f32.mrf.mxu0
  %227 = vmatprep.mubr.f32.mxu0 0.0
  %228 = vmatmul.mubr.f32.gmra.mxu0 %v108
  %v229 = vpop.f32.mrf.mxu0
  %v230 = vadd.f32 0.0, %v229
  %v231 = vpop.f32.mrf.mxu0
  %232 = vmatprep.mubr.f32.mxu0 0.0
  %233 = vmatmul.mubr.f32.gmra.mxu0 %v111
  %v234 = vpop.f32.mrf.mxu0
  %v235 = vadd.f32 0.0, %v234
  %v236 = vpop.f32.mrf.mxu0
  %237 = vmatprep.mubr.f32.mxu0 0.0
  %238 = vmatmul.mubr.f32.gmra.mxu0 %v114
  %v239 = vpop.f32.mrf.mxu0
  %v240 = vadd.f32 0.0, %v239
  %v241 = vpop.f32.mrf.mxu0
  %242 = vmatprep.mubr.f32.mxu0 0.0
  %243 = vmatmul.mubr.f32.gmra.mxu0 %v117
  %v244 = vpop.f32.mrf.mxu0
  %v245 = vadd.f32 0.0, %v244
  %v246 = vpop.f32.mrf.mxu0
  %247 = vmatprep.mubr.f32.mxu0 0.0
  %248 = vmatmul.mubr.f32.gmra.mxu0 %v120
  %v249 = vpop.f32.mrf.mxu0
  %v250 = vadd.f32 0.0, %v249
  %v251 = vpop.f32.mrf.mxu0
  %252 = vmatprep.mubr.f32.mxu0 0.0
  %253 = vmatmul.mubr.f32.gmra.mxu0 %v123
  %v254 = vpop.f32.mrf.mxu0
  %v255 = vadd.f32 0.0, %v254
  %v256 = vpop.f32.mrf.mxu0
  %257 = vmatprep.mubr.f32.mxu0 0.0
  %258 = vmatmul.mubr.f32.gmra.mxu0 %v126
  %v259 = vpop.f32.mrf.mxu0
  %v260 = vadd.f32 0.0, %v259
  %v261 = vpop.f32.mrf.mxu0
  %262 = vmatprep.mubr.f32.mxu0 0.0
  %263 = vmatmul.mubr.f32.gmra.mxu0 %v129
  %v264 = vpop.f32.mrf.mxu0
  %v265 = vadd.f32 0.0, %v264
  %v266 = vpop.f32.mrf.mxu0
  %267 = vmatprep.mubr.f32.mxu0 0.0
  %268 = vmatmul.mubr.f32.gmra.mxu0 %v132
  %v269 = vpop.f32.mrf.mxu0
  %v270 = vadd.f32 0.0, %v269
  %v271 = vpop.f32.mrf.mxu0
  %272 = vmatprep.mubr.f32.mxu0 0.0
  %273 = vmatmul.mubr.f32.gmra.mxu0 %v135
  %v274 = vpop.f32.mrf.mxu0
  %v275 = vadd.f32 0.0, %v274
  %v276 = vpop.f32.mrf.mxu0
  %277 = vmatprep.mubr.f32.mxu0 0.0
  %278 = vmatmul.mubr.f32.gmra.mxu0 %v138
  %v279 = vpop.f32.mrf.mxu0
  %v280 = vadd.f32 0.0, %v279
  %v281 = vpop.f32.mrf.mxu0
  %282 = vmatprep.mubr.f32.mxu0 0.0
  %283 = vmatmul.mubr.f32.gmra.mxu0 %v141
  %v284 = vpop.f32.mrf.mxu0
  %v285 = vadd.f32 0.0, %v284
  %v286 = vpop.f32.mrf.mxu0
  %287 = vdwg.mxu0
  %v288 = vadd.f32 %v46, %v210
  %v289 = vadd.f32 %v47, %v215
  %v290 = vadd.f32 %v48, %v220
  %v291 = vadd.f32 %v49, %v225
  %v292 = vadd.f32 %v50, %v230
  %v293 = vadd.f32 %v51, %v235
  %v294 = vadd.f32 %v52, %v240
  %v295 = vadd.f32 %v53, %v245
  %v296 = vadd.f32 %v54, %v250
  %v297 = vadd.f32 %v55, %v255
  %v298 = vadd.f32 %v56, %v260
  %v299 = vadd.f32 %v57, %v265
  %v300 = vadd.f32 %v58, %v270
  %v301 = vadd.f32 %v59, %v275
  %v302 = vadd.f32 %v60, %v280
  %v303 = vadd.f32 %v61, %v285
  %304 = vst [vmem:[%s1] sm:$0xff] %v288
  %305 = vst [vmem:[%s1 + $0x8] sm:$0xff] %v289
  %306 = vst [vmem:[%s1 + $0x10] sm:$0xff] %v290
  %307 = vst [vmem:[%s1 + $0x18] sm:$0xff] %v291
  %308 = vst [vmem:[%s1 + $0x20] sm:$0xff] %v292
  %309 = vst [vmem:[%s1 + $0x28] sm:$0xff] %v293
  %310 = vst [vmem:[%s1 + $0x30] sm:$0xff] %v294
  %311 = vst [vmem:[%s1 + $0x38] sm:$0xff] %v295
  %312 = vst [vmem:[%s1 + $0x40] sm:$0xff] %v296
  %313 = vst [vmem:[%s1 + $0x48] sm:$0xff] %v297
  %314 = vst [vmem:[%s1 + $0x50] sm:$0xff] %v298
  %315 = vst [vmem:[%s1 + $0x58] sm:$0xff] %v299
  %316 = vst [vmem:[%s1 + $0x60] sm:$0xff] %v300
  %317 = vst [vmem:[%s1 + $0x68] sm:$0xff] %v301
  %318 = vst [vmem:[%s1 + $0x70] sm:$0xff] %v302
  %319 = vst [vmem:[%s1 + $0x78] sm:$0xff] %v303
  // Predicated region
  $region10: #{get_krum.2} parent=0 // pred_check
    _
  $region11: #{get_krum.2} parent=0 // pred_check_branch
    %321 = sbr.rel (0) target = $region13
  $region12: #{get_krum.2} parent=0 // pred_region
    _
  $region13: #{get_krum.2} parent=0 // pred_fallthru
    _
  // Predicated region
  $region14: #{get_krum.2} parent=0 // pred_check
    _
  $region15: #{get_krum.2} parent=0 // pred_check_branch
    %323 = sbr.rel (0) target = $region17
  $region16: #{get_krum.2} parent=0 // pred_region
    _
  $region17: #{get_krum.2} parent=0 // pred_fallthru
    _

// kernel: get_krum.3
$region0: #{get_krum.3}
  #allocation0 [shape = 'u32[]', space=smem, size = 0x4, offset = 0x4, fixed_abs, tag = 'smem constant byte address 0x4 - core index']
  #allocation1 [shape = 'u32[144,128]{1,0:T(1,128)}', space=vmem, size = 0x12000, scoped, tag = 'internal scratch']
  %s0 = inlined_call_operand.vmem [shape: f32[128,32], index: 0, kind: input, shape index: {}]
  %s1 = inlined_call_operand.vmem [shape: f32[8,128], index: 1, kind: input, shape index: {}]
  %s2 = inlined_call_operand.vmem [shape: f32[8,32], index: 2, kind: output, shape index: {}]
  %s3 = sld [smem:[#allocation0]]
  $region18: #{get_krum.3} parent=0
    _
  %s5 = ssub.s32 1, %s3
  %s6 = scalar_select 0, %s5, %s3
  // Predicated region
  $region2: #{get_krum.3} parent=0 // pred_check
    _
  $region3: #{get_krum.3} parent=0 // pred_check_branch
    %8 = sbr.rel (0) target = $region5
  $region4: #{get_krum.3} parent=0 // pred_region
    _
  $region5: #{get_krum.3} parent=0 // pred_fallthru
    _
  // Predicated region
  $region6: #{get_krum.3} parent=0 // pred_check
    _
  $region7: #{get_krum.3} parent=0 // pred_check_branch
    %10 = sbr.rel (0) target = $region9
  $region8: #{get_krum.3} parent=0 // pred_region
    _
  $region9: #{get_krum.3} parent=0 // pred_fallthru
    _
  %v11 = vld [vmem:[%s1] sm:$0xff]
  %v12 = vld [vmem:[%s0] sm:$0xff]
  %v13 = vld [vmem:[%s0 + $0x8] sm:$0xff]
  %v14 = vld [vmem:[%s0 + $0x10] sm:$0xff]
  %v15 = vld [vmem:[%s0 + $0x18] sm:$0xff]
  %v16 = vld [vmem:[%s0 + $0x20] sm:$0xff]
  %v17 = vld [vmem:[%s0 + $0x28] sm:$0xff]
  %v18 = vld [vmem:[%s0 + $0x30] sm:$0xff]
  %v19 = vld [vmem:[%s0 + $0x38] sm:$0xff]
  %v20 = vld [vmem:[%s0 + $0x40] sm:$0xff]
  %v21 = vld [vmem:[%s0 + $0x48] sm:$0xff]
  %v22 = vld [vmem:[%s0 + $0x50] sm:$0xff]
  %v23 = vld [vmem:[%s0 + $0x58] sm:$0xff]
  %v24 = vld [vmem:[%s0 + $0x60] sm:$0xff]
  %v25 = vld [vmem:[%s0 + $0x68] sm:$0xff]
  %v26 = vld [vmem:[%s0 + $0x70] sm:$0xff]
  %v27 = vld [vmem:[%s0 + $0x78] sm:$0xff]
  %28 = vmatprep.subr.mxu0 0.0
  %29 = vmatpush1.msra.mxu0 %v27
  %30 = vmatprep.subr.mxu0 0.0
  %31 = vmatpush1.msra.mxu0 %v26
  %32 = vmatprep.subr.mxu0 0.0
  %33 = vmatpush1.msra.mxu0 %v25
  %34 = vmatprep.subr.mxu0 0.0
  %35 = vmatpush1.msra.mxu0 %v24
  %36 = vmatprep.subr.mxu0 0.0
  %37 = vmatpush1.msra.mxu0 %v23
  %38 = vmatprep.subr.mxu0 0.0
  %39 = vmatpush1.msra.mxu0 %v22
  %40 = vmatprep.subr.mxu0 0.0
  %41 = vmatpush1.msra.mxu0 %v21
  %42 = vmatprep.subr.mxu0 0.0
  %43 = vmatpush1.msra.mxu0 %v20
  %44 = vmatprep.subr.mxu0 0.0
  %45 = vmatpush1.msra.mxu0 %v19
  %46 = vmatprep.subr.mxu0 0.0
  %47 = vmatpush1.msra.mxu0 %v18
  %48 = vmatprep.subr.mxu0 0.0
  %49 = vmatpush1.msra.mxu0 %v17
  %50 = vmatprep.subr.mxu0 0.0
  %51 = vmatpush1.msra.mxu0 %v16
  %52 = vmatprep.subr.mxu0 0.0
  %53 = vmatpush1.msra.mxu0 %v15
  %54 = vmatprep.subr.mxu0 0.0
  %55 = vmatpush1.msra.mxu0 %v14
  %56 = vmatprep.subr.mxu0 0.0
  %57 = vmatpush1.msra.mxu0 %v13
  %58 = vmatprep.subr.mxu0 0.0
  %59 = vmatpush1.msra.mxu0 %v12
  %60 = vmatprep.subr.mxu0 0.0
  %61 = vmatpush2.msra.mxu0 0.0
  %62 = vmatprep.subr.mxu0 0.0
  %63 = vmatpush2.msra.mxu0 0.0
  %64 = vmatprep.subr.mxu0 0.0
  %65 = vmatpush2.msra.mxu0 0.0
  %66 = vmatprep.subr.mxu0 0.0
  %67 = vmatpush2.msra.mxu0 0.0
  %68 = vmatprep.subr.mxu0 0.0
  %69 = vmatpush2.msra.mxu0 0.0
  %70 = vmatprep.subr.mxu0 0.0
  %71 = vmatpush2.msra.mxu0 0.0
  %72 = vmatprep.subr.mxu0 0.0
  %73 = vmatpush2.msra.mxu0 0.0
  %74 = vmatprep.subr.mxu0 0.0
  %75 = vmatpush2.msra.mxu0 0.0
  %76 = vmatprep.subr.mxu0 0.0
  %77 = vmatpush2.msra.mxu0 0.0
  %78 = vmatprep.subr.mxu0 0.0
  %79 = vmatpush2.msra.mxu0 0.0
  %80 = vmatprep.subr.mxu0 0.0
  %81 = vmatpush2.msra.mxu0 0.0
  %82 = vmatprep.subr.mxu0 0.0
  %83 = vmatpush2.msra.mxu0 0.0
  %84 = vmatprep.subr.mxu0 0.0
  %85 = vmatpush2.msra.mxu0 0.0
  %86 = vmatprep.subr.mxu0 0.0
  %87 = vmatpush2.msra.mxu0 0.0
  %88 = vmatprep.subr.mxu0 0.0
  %89 = vmatpush2.msra.mxu0 0.0
  %90 = vmatprep.subr.mxu0 0.0
  %91 = vmatpush2.msra.mxu0 0.0
  %92 = vmatprep.mubr.f32.mxu0 0.0
  %93 = vmatmul.mubr.f32.gmra.mxu0 %v11
  %v94 = vpop.f32.mrf.mxu0
  %v95 = vadd.f32 0.0, %v94
  %v96 = vpop.f32.mrf.mxu0
  %97 = vdwg.mxu0
  %vm98 = vcmask 261120
  %99 = vst.msk [vmem:[%s2] sm:$0xff] %vm98, %v95
  // Predicated region
  $region10: #{get_krum.3} parent=0 // pred_check
    _
  $region11: #{get_krum.3} parent=0 // pred_check_branch
    %101 = sbr.rel (0) target = $region13
  $region12: #{get_krum.3} parent=0 // pred_region
    _
  $region13: #{get_krum.3} parent=0 // pred_fallthru
    _
  // Predicated region
  $region14: #{get_krum.3} parent=0 // pred_check
    _
  $region15: #{get_krum.3} parent=0 // pred_check_branch
    %103 = sbr.rel (0) target = $region17
  $region16: #{get_krum.3} parent=0 // pred_region
    _
  $region17: #{get_krum.3} parent=0 // pred_fallthru
    _

</llo_original>
